<compile_context>
chip_gen: v6e
topology: v6e:2x2x1
jax: 0.10.0
libtpu: 0.0.40
codegen_flags: <defaults>
</compile_context>

<pallas_src>
import functools

import jax
import jax.numpy as jnp
from jax.experimental import pallas as pl
from jax.experimental.pallas import tpu as pltpu

FREQ_BLOCKS = 2
TIME_BLOCKS = 10
FREQ_BLOCK_RATIO = 0.33
TIME_BLOCK_RATIO = 0.05

_MIN_PALLAS_BYTES = 1 << 20      # below this, a plain fused XLA select is faster
_TARGET_TILE_BYTES = 4 << 20     # 2-4 MiB tiles reach ~85%+ of HBM roofline
_MIN_TILE_BYTES = 256 << 10      # don't shrink tiles below this when adding grid steps
_LARGE_TOTAL_BYTES = 8 << 20     # above this, insist on enough steps to pipeline
_DESIRED_GRID_STEPS = 8          # >= 4 steps per TensorCore on v7x (2 TCs/chip)


def _specaugment_kernel(mask_ref, x_ref, o_ref):
    # mask_ref: VMEM (1, F, T), x's dtype, constant block (resident across grid steps).
    # x_ref / o_ref: VMEM (G, F, T) tile of fused (batch*channel) slices.
    x = x_ref[...]
    o_ref[...] = jnp.where(mask_ref[...] != 0, x, jnp.zeros((), x.dtype))


def _sample_keep_vector(key, num_masks, axis_size, ratio):
    """torchaudio mask_along_axis sampling -> 1D boolean keep vector of length axis_size."""
    mask_param = int(axis_size * ratio)
    idx = jnp.arange(axis_size, dtype=jnp.int32)
    keep = jnp.ones((axis_size,), dtype=jnp.bool_)
    for _ in range(num_masks):
        key, k1, k2 = jax.random.split(key, 3)
        value = jax.random.uniform(k1, (), jnp.float32) * mask_param
        min_value = jax.random.uniform(k2, (), jnp.float32) * (axis_size - value)
        start = jnp.floor(min_value).astype(jnp.int32)
        end = jnp.floor(min_value + value).astype(jnp.int32)
        keep = keep & jnp.logical_not((idx >= start) & (idx < end))
    return key, keep


def _vmem_limit_bytes():
    """Explicit scoped-VMEM budget: generation-aware, capped at 48 MiB (safe on v7x's 64 MiB)."""
    try:
        cap = int(getattr(pltpu.get_tpu_info(), "vmem_capacity_bytes", 64 << 20))
    except Exception:
        cap = 64 << 20
    return int(min(48 << 20, (3 * cap) // 4))


def _choose_group(bc, slice_bytes, target_tile_bytes):
    """Pick G = number of (batch*channel) slices fused per grid step (a divisor of bc).

    Largest G whose (G, F, T) tile fits the per-tile target; for large inputs shrink G so
    there are >= _DESIRED_GRID_STEPS grid steps (steady-state DMA pipeline, v7x megacore),
    but never below _MIN_TILE_BYTES per tile.
    """
    divisors = [g for g in range(1, bc + 1) if bc % g == 0]
    fitting = [g for g in divisors if g * slice_bytes <= target_tile_bytes]
    g = max(fitting) if fitting else 1
    total_bytes = bc * slice_bytes
    if total_bytes >= _LARGE_TOTAL_BYTES:
        desired = min(_DESIRED_GRID_STEPS, bc)
        while bc // g < desired:
            smaller = [d for d in divisors if d < g]
            if not smaller or smaller[-1] * slice_bytes < _MIN_TILE_BYTES:
                break
            g = smaller[-1]
    return g


@functools.partial(jax.jit, static_argnames=("use_pallas",))
def spec_augment(x, key, use_pallas=None):
    B, C, F, T = x.shape
    BC = B * C
    itemsize = jnp.dtype(x.dtype).itemsize
    total_bytes = BC * F * T * itemsize

    if use_pallas is None:
        use_pallas = total_bytes >= _MIN_PALLAS_BYTES

    # --- shared (iid_masks=False) keep mask, built once, separable ----------------------
    key, keep_f = _sample_keep_vector(key, FREQ_BLOCKS, F, FREQ_BLOCK_RATIO)
    key, keep_t = _sample_keep_vector(key, TIME_BLOCKS, T, TIME_BLOCK_RATIO)
    mask2d = keep_f.astype(x.dtype)[:, None] * keep_t.astype(x.dtype)[None, :]  # (F, T)

    if not use_pallas:
        # Tiny inputs: pallas_call launch/per-step overhead dominates an HBM-bound op.
        return jnp.where(mask2d[None, None] != 0, x, jnp.zeros((), x.dtype))

    # --- pad so T (lane axis) is a multiple of 128 and F (sublane) a multiple of 8 ------
    Fp = -(-F // 8) * 8
    Tp = -(-T // 128) * 128
    xf = x.reshape(BC, F, T)
    mask = mask2d
    if (Fp, Tp) != (F, T):
        xf = jnp.pad(xf, ((0, 0), (0, Fp - F), (0, Tp - T)))
        mask = jnp.pad(mask2d, ((0, Fp - F), (0, Tp - T)))
    mask = mask.reshape(1, Fp, Tp)

    # --- tiling policy -------------------------------------------------------------------
    slice_bytes = Fp * Tp * itemsize
    mask_bytes = slice_bytes
    vmem_limit = _vmem_limit_bytes()
    # Footprint ~= 4 * tile (double-buffered in + out) + 2 * mask; //6 leaves headroom.
    target_tile = min(_TARGET_TILE_BYTES,
                      max(_MIN_TILE_BYTES, (vmem_limit - 2 * mask_bytes) // 6))
    G = _choose_group(BC, slice_bytes, target_tile)
    grid = (BC // G,)

    grid_spec = pltpu.PrefetchScalarGridSpec(
        num_scalar_prefetch=0,
        grid=grid,
        in_specs=[
            # Mask: constant block index -> stays resident in VMEM, never re-DMA'd.
            pl.BlockSpec((1, Fp, Tp), lambda i: (0, 0, 0)),
            pl.BlockSpec((G, Fp, Tp), lambda i: (i, 0, 0)),
        ],
        out_specs=pl.BlockSpec((G, Fp, Tp), lambda i: (i, 0, 0)),
    )

    out = pl.pallas_call(
        _specaugment_kernel,
        out_shape=jax.ShapeDtypeStruct((BC, Fp, Tp), x.dtype),
        grid_spec=grid_spec,
        compiler_params=pltpu.CompilerParams(
            dimension_semantics=("parallel",),
            vmem_limit_bytes=vmem_limit,
        ),
        # SpecAugment is naturally in-place: output aliases the spectrogram input (index 1).
        input_output_aliases={1: 0},
        cost_estimate=pl.CostEstimate(
            flops=BC * Fp * Tp,
            transcendentals=0,
            bytes_accessed=2 * BC * Fp * Tp * itemsize + Fp * Tp * itemsize,
        ),
    )(mask, xf)

    if (Fp, Tp) != (F, T):
        out = out[:, :F, :T]
    return out.reshape(B, C, F, T)


if __name__ == "__main__":
    key = jax.random.PRNGKey(0)
    k_data, k_mask = jax.random.split(key)

    # (B, C, freq_bins, time_steps); T=128 keeps output stores lane-dense.
    B, C, F, T = 2, 4, 16, 128
    x = jax.random.normal(k_data, (B, C, F, T), dtype=jnp.float32)

    # Force the Pallas path for the demo (auto-dispatch would pick XLA for sub-MiB inputs).
    y = spec_augment(x, k_mask, use_pallas=True)
    y = jax.block_until_ready(y)

    assert y.shape == x.shape and y.dtype == x.dtype
    # sanity: output entries are either the input value or exactly zero (masking only zeroes)
    assert bool(jnp.all((y == x) | (y == 0)))
    print("KERNEL_OK")
</pallas_src>

<mosaic_0001>
module attributes {stable_mosaic.version = 11 : i64} {
  func.func @_specaugment_kernel(%arg0: i32, %arg1: memref<1x16x128xf32, #tpu.memory_space<vmem>>, %arg2: memref<8x16x128xf32, #tpu.memory_space<vmem>>, %arg3: memref<8x16x128xf32, #tpu.memory_space<vmem>>) attributes {dimension_semantics = [#tpu.dimension_semantics<parallel>], iteration_bounds = array<i64: 1>, scalar_prefetch = 0 : i64, scratch_operands = 0 : i64, tpu.core_type = #tpu.core_type<tc>, window_params = [{pipeline_mode = #tpu.pipeline_mode<synchronous>, transform_indices = @transform_0, window_bounds = array<i64: 1, 16, 128>}, {transform_indices = @transform_1, window_bounds = array<i64: 8, 16, 128>}, {transform_indices = @transform_2, window_bounds = array<i64: 8, 16, 128>}]} {
    %c0 = arith.constant 0 : index
    %c0_0 = arith.constant 0 : index
    %c0_1 = arith.constant 0 : index
    %0 = vector.load %arg2[%c0, %c0_0, %c0_1] : memref<8x16x128xf32, #tpu.memory_space<vmem>>, vector<8x16x128xf32>
    %c0_2 = arith.constant 0 : index
    %c0_3 = arith.constant 0 : index
    %c0_4 = arith.constant 0 : index
    %1 = vector.load %arg1[%c0_2, %c0_3, %c0_4] : memref<1x16x128xf32, #tpu.memory_space<vmem>>, vector<1x16x128xf32>
    %cst = arith.constant 0.000000e+00 : f32
    %2 = vector.broadcast %cst : f32 to vector<1x16x128xf32>
    %3 = arith.cmpf one, %1, %2 : vector<1x16x128xf32>
    %cst_5 = arith.constant 0.000000e+00 : f32
    %4 = vector.shape_cast %3 : vector<1x16x128xi1> to vector<1x16x128xi1>
    %5 = vector.broadcast %4 : vector<1x16x128xi1> to vector<8x16x128xi1>
    %6 = vector.broadcast %cst_5 : f32 to vector<8x16x128xf32>
    %7 = arith.select %5, %0, %6 : vector<8x16x128xi1>, vector<8x16x128xf32>
    %c0_6 = arith.constant 0 : index
    %c0_7 = arith.constant 0 : index
    %c0_8 = arith.constant 0 : index
    %8 = vector.load %arg3[%c0_6, %c0_7, %c0_8] : memref<8x16x128xf32, #tpu.memory_space<vmem>>, vector<8x16x128xf32>
    tpu.vector_store %arg3[%c0_6, %c0_7, %c0_8], %7 {strides = array<i32>} : memref<8x16x128xf32, #tpu.memory_space<vmem>>, vector<8x16x128xf32>,
    return
  }
  func.func @transform_0(%arg0: i32) -> (i32, i32, i32) {
    %c0_i32 = arith.constant 0 : i32
    %c0_i32_0 = arith.constant 0 : i32
    %c0_i32_1 = arith.constant 0 : i32
    %c0_i32_2 = arith.constant 0 : i32
    return %c0_i32, %c0_i32_0, %c0_i32_1 : i32, i32, i32
  }
  func.func @transform_1(%arg0: i32) -> (i32, i32, i32) {
    %c0_i32 = arith.constant 0 : i32
    %c0_i32_0 = arith.constant 0 : i32
    %c0_i32_1 = arith.constant 0 : i32
    return %arg0, %c0_i32, %c0_i32_0 : i32, i32, i32
  }
  func.func @transform_2(%arg0: i32) -> (i32, i32, i32) {
    %c0_i32 = arith.constant 0 : i32
    %c0_i32_0 = arith.constant 0 : i32
    %c0_i32_1 = arith.constant 0 : i32
    return %arg0, %c0_i32, %c0_i32_0 : i32, i32, i32
  }
}

</mosaic_0001>

<llo_original>
// kernel: spec_augment.1
$region0: #{spec_augment.1}
  #allocation0 [shape = 'u32[]', space=smem, size = 0x4, offset = 0x4, fixed_abs, tag = 'smem constant byte address 0x4 - core index']
  #allocation1 [shape = 'u32[144,128]{1,0:T(1,128)}', space=vmem, size = 0x12000, scoped, tag = 'internal scratch']
  %s0 = inlined_call_operand.vmem [shape: f32[1,16,128], index: 0, kind: input, shape index: {}]
  %s1 = inlined_call_operand.vmem [shape: f32[8,16,128], index: 1, kind: input, shape index: {}, may-alias: {1,2}]
  %s2 = inlined_call_operand.vmem [shape: f32[8,16,128], index: 2, kind: output, shape index: {}, may-alias: {1,2}]
  %s3 = sld [smem:[#allocation0]]
  $region18: #{spec_augment.1} parent=0
    _
  %s5 = ssub.s32 1, %s3
  %s6 = scalar_select 0, %s5, %s3
  // Predicated region
  $region2: #{spec_augment.1} parent=0 // pred_check
    _
  $region3: #{spec_augment.1} parent=0 // pred_check_branch
    %8 = sbr.rel (0) target = $region5
  $region4: #{spec_augment.1} parent=0 // pred_region
    _
  $region5: #{spec_augment.1} parent=0 // pred_fallthru
    _
  // Predicated region
  $region6: #{spec_augment.1} parent=0 // pred_check
    _
  $region7: #{spec_augment.1} parent=0 // pred_check_branch
    %10 = sbr.rel (0) target = $region9
  $region8: #{spec_augment.1} parent=0 // pred_region
    _
  $region9: #{spec_augment.1} parent=0 // pred_fallthru
    _
  %v11 = vld [vmem:[%s1] sm:$0xff]
  %v12 = vld [vmem:[%s1 + $0x8] sm:$0xff]
  %v13 = vld [vmem:[%s1 + $0x10] sm:$0xff]
  %v14 = vld [vmem:[%s1 + $0x18] sm:$0xff]
  %v15 = vld [vmem:[%s1 + $0x20] sm:$0xff]
  %v16 = vld [vmem:[%s1 + $0x28] sm:$0xff]
  %v17 = vld [vmem:[%s1 + $0x30] sm:$0xff]
  %v18 = vld [vmem:[%s1 + $0x38] sm:$0xff]
  %v19 = vld [vmem:[%s1 + $0x40] sm:$0xff]
  %v20 = vld [vmem:[%s1 + $0x48] sm:$0xff]
  %v21 = vld [vmem:[%s1 + $0x50] sm:$0xff]
  %v22 = vld [vmem:[%s1 + $0x58] sm:$0xff]
  %v23 = vld [vmem:[%s1 + $0x60] sm:$0xff]
  %v24 = vld [vmem:[%s1 + $0x68] sm:$0xff]
  %v25 = vld [vmem:[%s1 + $0x70] sm:$0xff]
  %v26 = vld [vmem:[%s1 + $0x78] sm:$0xff]
  %v27 = vld [vmem:[%s0] sm:$0xff]
  %v28 = vld [vmem:[%s0 + $0x8] sm:$0xff]
  %vm29 = vcmp.ne.f32.partialorder %v27, 0.0
  %vm30 = vcmp.ne.f32.partialorder %v28, 0.0
  %v31 = vsel %vm29, 1, 0
  %v32 = vsel %vm30, 1, 0
  %vm33 = vcmp.eq.s32.totalorder %v31, 1
  %vm34 = vcmp.eq.s32.totalorder %v32, 1
  %v35 = vsel %vm33, %v11, 0.0
  %v36 = vsel %vm34, %v12, 0.0
  %v37 = vsel %vm33, %v13, 0.0
  %v38 = vsel %vm34, %v14, 0.0
  %v39 = vsel %vm33, %v15, 0.0
  %v40 = vsel %vm34, %v16, 0.0
  %v41 = vsel %vm33, %v17, 0.0
  %v42 = vsel %vm34, %v18, 0.0
  %v43 = vsel %vm33, %v19, 0.0
  %v44 = vsel %vm34, %v20, 0.0
  %v45 = vsel %vm33, %v21, 0.0
  %v46 = vsel %vm34, %v22, 0.0
  %v47 = vsel %vm33, %v23, 0.0
  %v48 = vsel %vm34, %v24, 0.0
  %v49 = vsel %vm33, %v25, 0.0
  %v50 = vsel %vm34, %v26, 0.0
  %51 = vst [vmem:[%s2] sm:$0xff] %v35
  %52 = vst [vmem:[%s2 + $0x8] sm:$0xff] %v36
  %53 = vst [vmem:[%s2 + $0x10] sm:$0xff] %v37
  %54 = vst [vmem:[%s2 + $0x18] sm:$0xff] %v38
  %55 = vst [vmem:[%s2 + $0x20] sm:$0xff] %v39
  %56 = vst [vmem:[%s2 + $0x28] sm:$0xff] %v40
  %57 = vst [vmem:[%s2 + $0x30] sm:$0xff] %v41
  %58 = vst [vmem:[%s2 + $0x38] sm:$0xff] %v42
  %59 = vst [vmem:[%s2 + $0x40] sm:$0xff] %v43
  %60 = vst [vmem:[%s2 + $0x48] sm:$0xff] %v44
  %61 = vst [vmem:[%s2 + $0x50] sm:$0xff] %v45
  %62 = vst [vmem:[%s2 + $0x58] sm:$0xff] %v46
  %63 = vst [vmem:[%s2 + $0x60] sm:$0xff] %v47
  %64 = vst [vmem:[%s2 + $0x68] sm:$0xff] %v48
  %65 = vst [vmem:[%s2 + $0x70] sm:$0xff] %v49
  %66 = vst [vmem:[%s2 + $0x78] sm:$0xff] %v50
  // Predicated region
  $region10: #{spec_augment.1} parent=0 // pred_check
    _
  $region11: #{spec_augment.1} parent=0 // pred_check_branch
    %68 = sbr.rel (0) target = $region13
  $region12: #{spec_augment.1} parent=0 // pred_region
    _
  $region13: #{spec_augment.1} parent=0 // pred_fallthru
    _
  // Predicated region
  $region14: #{spec_augment.1} parent=0 // pred_check
    _
  $region15: #{spec_augment.1} parent=0 // pred_check_branch
    %70 = sbr.rel (0) target = $region17
  $region16: #{spec_augment.1} parent=0 // pred_region
    _
  $region17: #{spec_augment.1} parent=0 // pred_fallthru
    _

</llo_original>
